<compile_context>
chip_gen: v7x
topology: tpu7x:2x2x1
jax: 0.10.0
libtpu: 0.0.40
codegen_flags: <defaults>
</compile_context>

<pallas_src>
import functools

import jax
import jax.numpy as jnp
from jax import lax
from jax.experimental import pallas as pl
from jax.experimental.pallas import tpu as pltpu

_LANE = 128


def _round_up(n, m):
    return ((n + m - 1) // m) * m


def _self_attention_kernel(x_ref, w_ref, b_ref, out_ref, rel_ref, *,
                           inv_sqrt_d, approx_recip):
    """One grid step: batch block `bb` x query tile `tq` against all S keys.

    x_ref:   (bb, S, D)   activations for this batch block (all segments)
    w_ref:   (D, 3*Hp)    fused, lane-padded [phi | theta | g] weights
    b_ref:   (1, 3*Hp)    fused, lane-padded biases
    out_ref: (bb, tq, D)  a_att + audio_feature   (query-row tile)
    rel_ref: (bb, tq, S)  normalized relation rows (query-row tile)
    """
    bb, S, D = x_ref.shape
    tq = out_ref.shape[1]
    Hp = w_ref.shape[1] // 3
    mm = x_ref.dtype                   # bf16 in production, f32 for the test

    x = x_ref[...]                                              # (bb, S, D)

    # Fused phi/theta/g projection with the batch folded into the MXU M dim:
    # one (bb*S, D) @ (D, 3*Hp) matmul fills the systolic array rows.
    proj = jnp.dot(x.reshape(bb * S, D), w_ref[...],
                   preferred_element_type=jnp.float32)
    proj = (proj + b_ref[...]).reshape(bb, S, 3 * Hp)

    # Hp is 128-aligned -> these slices are free lane views.
    phi = proj[..., 0 * Hp:1 * Hp]                              # (bb, S, Hp)
    theta = proj[..., 1 * Hp:2 * Hp]
    g = proj[..., 2 * Hp:3 * Hp]

    if tq == S:                                                 # no query tiling
        phi_q, theta_q, x_q = phi, theta, x
    else:
        q0 = pl.multiple_of(pl.program_id(1) * tq, tq)
        phi_q = lax.dynamic_slice_in_dim(phi, q0, tq, axis=1)
        theta_q = lax.dynamic_slice_in_dim(theta, q0, tq, axis=1)
        x_q = lax.dynamic_slice_in_dim(x, q0, tq, axis=1)

    # rel[b,q,k]   = phi_q[b,q] . theta[b,k]   (contract last dims; no transpose)
    # rel_t[b,q,k] = theta_q[b,q] . phi[b,k]  == rel[b,k,q]
    # Symmetrization via a second MXU matmul instead of an XLU swapaxes.
    dn = (((2,), (2,)), ((0,), (0,)))
    rel_qk = lax.dot_general(phi_q.astype(mm), theta.astype(mm), dn,
                             preferred_element_type=jnp.float32)   # (bb, tq, S)
    rel_kq = lax.dot_general(theta_q.astype(mm), phi.astype(mm), dn,
                             preferred_element_type=jnp.float32)   # (bb, tq, S)

    # relu(x/sqrt(D)) then average with the transposed partner (== module order,
    # since relu is elementwise and the scale is shared).
    rel = 0.5 * (jnp.maximum(rel_qk * inv_sqrt_d, 0.0)
                 + jnp.maximum(rel_kq * inv_sqrt_d, 0.0))

    row_sum = jnp.sum(rel, axis=-1, keepdims=True)                 # (bb, tq, 1)
    # approx=True routes 1/x to the EUP (otherwise-idle slot) in production;
    # exact path kept for the bit-faithful comparison in the demo.
    inv = pl.reciprocal(row_sum + 1e-8, approx=approx_recip)
    rel = rel * inv

    # a_att = rel @ g, batched over the leading dim.
    att = lax.dot_general(rel.astype(mm), g.astype(mm),
                          (((2,), (1,)), ((0,), (0,))),
                          preferred_element_type=jnp.float32)      # (bb, tq, Hp)

    out_ref[...] = (att[..., :D] + x_q.astype(jnp.float32)).astype(out_ref.dtype)
    rel_ref[...] = rel.astype(rel_ref.dtype)


def _choose_block_sizes(B, S, D, Hp, in_itemsize, vmem_budget):
    """Pick (bb, tq): batch-block and query-tile sizes.

    Prefer >=4 grid steps (pipeline overlap + megacore sharding) while keeping
    per-step blocks as large as the VMEM budget allows.  Tile the query rows
    only when one batch element's full (S, S) relation block would overflow
    VMEM (matters on v7x's 64 MiB).
    """
    def footprint(bb, tq):
        x_blk = bb * S * D * in_itemsize
        w_blk = (D * 3 * Hp + 3 * Hp) * in_itemsize
        out_blk = bb * tq * D * 4
        rel_blk = bb * tq * S * 4
        proj = bb * S * 3 * Hp * 4
        temps = 3 * bb * tq * S * 4 + bb * tq * Hp * 4
        return 2 * (x_blk + w_blk + out_blk + rel_blk) + proj + temps

    divisors = [d for d in range(1, B + 1) if B % d == 0]
    bb = max((d for d in divisors if B // d >= min(4, B)), default=1)
    tq = S
    while footprint(bb, tq) > vmem_budget and bb > 1:
        bb = max(d for d in divisors if d < bb)
    if footprint(bb, tq) > vmem_budget:
        q_tiles = sorted((d for d in range(8, S, 8) if S % d == 0), reverse=True)
        for d in q_tiles:
            if footprint(bb, d) <= vmem_budget:
                tq = d
                break
        else:
            tq = q_tiles[-1] if q_tiles else S   # best effort
    return bb, tq


def self_attention(x, w_phi, b_phi, w_theta, b_theta, w_g, b_g, *,
                   matmul_dtype=None, approx_recip=False, rel_dtype=jnp.float32):
    """x: (B, S, D) f32; weights: (D, H) pre-transposed; biases: (H,).

    Returns (a_att_plus_ori, a_seg_rel) matching the PyTorch forward.
    Set matmul_dtype=jnp.bfloat16 / approx_recip=True / rel_dtype=jnp.bfloat16
    for production on v5e/v6e/v7x (breaks the 1e-5 bit-faithful check).
    """
    B, S, D = x.shape
    H = w_phi.shape[1]
    assert H == D, "residual add requires hidden_dim == audio_emb_dim (as in the PyTorch module)"

    # Zero-pad each projection width to a lane multiple, then fuse into one
    # (D, 3*Hp) weight / (1, 3*Hp) bias.  The zero pad is mathematically exact.
    Hp = _round_up(H, _LANE)
    pad_w = lambda w: jnp.pad(w, ((0, 0), (0, Hp - H))) if Hp != H else w
    pad_b = lambda b: jnp.pad(b, (0, Hp - H)) if Hp != H else b
    w_all = jnp.concatenate([pad_w(w_phi), pad_w(w_theta), pad_w(w_g)], axis=1)
    b_all = jnp.concatenate([pad_b(b_phi), pad_b(b_theta), pad_b(b_g)],
                            axis=0).reshape(1, 3 * Hp)

    x_in = x
    if matmul_dtype is not None:       # bf16 operands, f32 accumulate/elementwise
        x_in = x.astype(matmul_dtype)
        w_all = w_all.astype(matmul_dtype)
    # biases stay f32 (added after the f32-accumulated matmul)

    # Per-generation VMEM budget (~85% of physical: ~108 MiB v5e/v6e, ~54 MiB v7x).
    try:
        vmem_cap = int(pltpu.get_tpu_info().vmem_capacity_bytes)
    except Exception:
        vmem_cap = 64 * 1024 * 1024    # conservative fallback, safe everywhere
    vmem_budget = int(vmem_cap * 0.85)

    bb, tq = _choose_block_sizes(B, S, D, Hp, jnp.dtype(x_in.dtype).itemsize,
                                 vmem_budget)
    num_b, num_q = B // bb, S // tq

    kernel = functools.partial(
        _self_attention_kernel,
        inv_sqrt_d=float(1.0 / (D ** 0.5)),
        approx_recip=approx_recip)

    in_isz = jnp.dtype(x_in.dtype).itemsize
    flops = (2 * B * S * D * 3 * Hp * num_q        # projection (recomputed per q-tile)
             + 2 * 2 * B * S * S * Hp              # rel + symmetrization partner
             + 2 * B * S * S * Hp)                 # rel @ g
    bytes_accessed = (B * S * D * in_isz
                      + (D * 3 * Hp + 3 * Hp) * in_isz
                      + B * S * D * 4
                      + B * S * S * jnp.dtype(rel_dtype).itemsize)

    out, rel = pl.pallas_call(
        kernel,
        out_shape=(
            jax.ShapeDtypeStruct((B, S, D), x.dtype),
            jax.ShapeDtypeStruct((B, S, S), rel_dtype),
        ),
        grid_spec=pltpu.PrefetchScalarGridSpec(
            num_scalar_prefetch=0,
            grid=(num_b, num_q),
            in_specs=[
                pl.BlockSpec((bb, S, D), lambda bi, qi: (bi, 0, 0)),   # x (all keys)
                pl.BlockSpec((D, 3 * Hp), lambda bi, qi: (0, 0)),      # fused weights
                pl.BlockSpec((1, 3 * Hp), lambda bi, qi: (0, 0)),      # fused biases
            ],
            out_specs=[
                pl.BlockSpec((bb, tq, D), lambda bi, qi: (bi, qi, 0)),  # a_att + x
                pl.BlockSpec((bb, tq, S), lambda bi, qi: (bi, qi, 0)),  # a_seg_rel
            ],
        ),
        compiler_params=pltpu.CompilerParams(
            dimension_semantics=("parallel", "parallel"),
            vmem_limit_bytes=vmem_budget),
        cost_estimate=pl.CostEstimate(
            flops=flops,
            transcendentals=B * S if approx_recip else 0,
            bytes_accessed=bytes_accessed),
    )(x_in, w_all, b_all)
    return out, rel


def _xavier_uniform(key, in_dim, out_dim):
    bound = jnp.sqrt(6.0 / (in_dim + out_dim))
    return jax.random.uniform(key, (in_dim, out_dim), jnp.float32, -bound, bound)


def _reference(x, w_phi, b_phi, w_theta, b_theta, w_g, b_g):
    D = x.shape[-1]
    phi = x @ w_phi + b_phi
    theta = x @ w_theta + b_theta
    g = x @ w_g + b_g
    rel = jnp.einsum("bsh,bth->bst", phi, theta) / jnp.sqrt(jnp.float32(D))
    rel = jax.nn.relu(rel)
    rel = (rel + jnp.swapaxes(rel, 1, 2)) / 2
    rel = rel / (jnp.sum(rel, axis=-1, keepdims=True) + 1e-8)
    att = jnp.einsum("bst,bth->bsh", rel, g)
    return att + x, rel


if __name__ == "__main__":
    # Small shapes consistent with the module: the residual add in the PyTorch
    # forward implies hidden_dim == audio_emb_dim.
    B, S, D = 2, 8, 32
    H = D

    key = jax.random.PRNGKey(0)
    kx, kp, kt, kg = jax.random.split(key, 4)

    x = jax.random.normal(kx, (B, S, D), jnp.float32)

    w_phi = _xavier_uniform(kp, D, H)
    w_theta = _xavier_uniform(kt, D, H)
    w_g = _xavier_uniform(kg, D, H)
    # biases filled with 0, as in init_layers
    b_phi = jnp.zeros((H,), jnp.float32)
    b_theta = jnp.zeros((H,), jnp.float32)
    b_g = jnp.zeros((H,), jnp.float32)

    # Bit-faithful path (f32 matmuls, exact reciprocal).  For production use
    # matmul_dtype=jnp.bfloat16, approx_recip=True (and optionally bf16 rel).
    out, rel = self_attention(x, w_phi, b_phi, w_theta, b_theta, w_g, b_g)
    out = jax.block_until_ready(out)
    rel = jax.block_until_ready(rel)

    ref_out, ref_rel = _reference(x, w_phi, b_phi, w_theta, b_theta, w_g, b_g)
    assert jnp.allclose(out, ref_out, atol=1e-5, rtol=1e-5), \
        float(jnp.max(jnp.abs(out - ref_out)))
    assert jnp.allclose(rel, ref_rel, atol=1e-5, rtol=1e-5), \
        float(jnp.max(jnp.abs(rel - ref_rel)))

    print("KERNEL_OK")
</pallas_src>

<mosaic_0001>
module attributes {stable_mosaic.version = 11 : i64} {
  func.func @_self_attention_kernel(%arg0: i32, %arg1: i32, %arg2: memref<1x8x32xf32, #tpu.memory_space<vmem>>, %arg3: memref<32x384xf32, #tpu.memory_space<vmem>>, %arg4: memref<1x384xf32, #tpu.memory_space<vmem>>, %arg5: memref<1x8x32xf32, #tpu.memory_space<vmem>>, %arg6: memref<1x8x8xf32, #tpu.memory_space<vmem>>) attributes {dimension_semantics = [#tpu.dimension_semantics<parallel>, #tpu.dimension_semantics<parallel>], iteration_bounds = array<i64: 2, 1>, scalar_prefetch = 0 : i64, scratch_operands = 0 : i64, tpu.core_type = #tpu.core_type<tc>, window_params = [{transform_indices = @transform_0, window_bounds = array<i64: 1, 8, 32>}, {pipeline_mode = #tpu.pipeline_mode<synchronous>, transform_indices = @transform_1, window_bounds = array<i64: 32, 384>}, {pipeline_mode = #tpu.pipeline_mode<synchronous>, transform_indices = @transform_2, window_bounds = array<i64: 1, 384>}, {transform_indices = @transform_3, window_bounds = array<i64: 1, 8, 32>}, {transform_indices = @transform_4, window_bounds = array<i64: 1, 8, 8>}]} {
    %c0 = arith.constant 0 : index
    %c0_0 = arith.constant 0 : index
    %c0_1 = arith.constant 0 : index
    %0 = vector.load %arg2[%c0, %c0_0, %c0_1] : memref<1x8x32xf32, #tpu.memory_space<vmem>>, vector<1x8x32xf32>
    %1 = vector.shape_cast %0 : vector<1x8x32xf32> to vector<8x32xf32>
    %c0_2 = arith.constant 0 : index
    %c0_3 = arith.constant 0 : index
    %2 = vector.load %arg3[%c0_2, %c0_3] : memref<32x384xf32, #tpu.memory_space<vmem>>, vector<32x384xf32>
    %cst = arith.constant dense<0.000000e+00> : vector<8x384xf32>
    %3 = tpu.matmul %1, %2, %cst {dimension_numbers = #tpu.dot_dimension_numbers<[1], [0], [0], [1], [0, 0, 1, 1], [], []>} : vector<8x32xf32>, vector<32x384xf32>, vector<8x384xf32> -> vector<8x384xf32>
    %c0_4 = arith.constant 0 : index
    %c0_5 = arith.constant 0 : index
    %4 = vector.load %arg4[%c0_4, %c0_5] : memref<1x384xf32, #tpu.memory_space<vmem>>, vector<1x384xf32>
    %5 = vector.broadcast %4 : vector<1x384xf32> to vector<8x384xf32>
    %6 = arith.addf %3, %5 : vector<8x384xf32>
    %7 = vector.shape_cast %6 : vector<8x384xf32> to vector<1x8x384xf32>
    %8 = vector.extract_strided_slice %7 {offsets = [0, 0, 0], sizes = [1, 8, 128], strides = [1, 1, 1]} : vector<1x8x384xf32> to vector<1x8x128xf32>
    %9 = vector.extract_strided_slice %7 {offsets = [0, 0, 128], sizes = [1, 8, 128], strides = [1, 1, 1]} : vector<1x8x384xf32> to vector<1x8x128xf32>
    %10 = vector.extract_strided_slice %7 {offsets = [0, 0, 256], sizes = [1, 8, 128], strides = [1, 1, 1]} : vector<1x8x384xf32> to vector<1x8x128xf32>
    %cst_6 = arith.constant dense<0.000000e+00> : vector<1x8x8xf32>
    %11 = tpu.matmul %8, %9, %cst_6 {dimension_numbers = #tpu.dot_dimension_numbers<[2], [2], [1], [1], [0, 0, 0, 1, 1, 1], [0], [0]>} : vector<1x8x128xf32>, vector<1x8x128xf32>, vector<1x8x8xf32> -> vector<1x8x8xf32>
    %cst_7 = arith.constant dense<0.000000e+00> : vector<1x8x8xf32>
    %12 = tpu.matmul %9, %8, %cst_7 {dimension_numbers = #tpu.dot_dimension_numbers<[2], [2], [1], [1], [0, 0, 0, 1, 1, 1], [0], [0]>} : vector<1x8x128xf32>, vector<1x8x128xf32>, vector<1x8x8xf32> -> vector<1x8x8xf32>
    %cst_8 = arith.constant 0.176776692 : f32
    %13 = vector.broadcast %cst_8 : f32 to vector<1x8x8xf32>
    %14 = arith.mulf %11, %13 : vector<1x8x8xf32>
    %cst_9 = arith.constant 0.000000e+00 : f32
    %15 = vector.broadcast %cst_9 : f32 to vector<1x8x8xf32>
    %16 = arith.maximumf %14, %15 : vector<1x8x8xf32>
    %cst_10 = arith.constant 0.176776692 : f32
    %17 = vector.broadcast %cst_10 : f32 to vector<1x8x8xf32>
    %18 = arith.mulf %12, %17 : vector<1x8x8xf32>
    %cst_11 = arith.constant 0.000000e+00 : f32
    %19 = vector.broadcast %cst_11 : f32 to vector<1x8x8xf32>
    %20 = arith.maximumf %18, %19 : vector<1x8x8xf32>
    %21 = arith.addf %16, %20 : vector<1x8x8xf32>
    %cst_12 = arith.constant 5.000000e-01 : f32
    %22 = vector.broadcast %cst_12 : f32 to vector<1x8x8xf32>
    %23 = arith.mulf %22, %21 : vector<1x8x8xf32>
    %cst_13 = arith.constant dense<0.000000e+00> : vector<1x8xf32>
    %24 = vector.multi_reduction <add>, %23, %cst_13 [2] : vector<1x8x8xf32> to vector<1x8xf32>
    %25 = vector.shape_cast %24 : vector<1x8xf32> to vector<1x8x1xf32>
    %cst_14 = arith.constant 9.99999993E-9 : f32
    %26 = vector.broadcast %cst_14 : f32 to vector<1x8x1xf32>
    %27 = arith.addf %25, %26 : vector<1x8x1xf32>
    %28 = tpu.reciprocal %27 : vector<1x8x1xf32> -> vector<1x8x1xf32>
    %29 = vector.broadcast %28 : vector<1x8x1xf32> to vector<1x8x8xf32>
    %30 = arith.mulf %23, %29 : vector<1x8x8xf32>
    %cst_15 = arith.constant dense<0.000000e+00> : vector<1x8x128xf32>
    %31 = tpu.matmul %30, %10, %cst_15 {dimension_numbers = #tpu.dot_dimension_numbers<[2], [1], [1], [2], [0, 0, 0, 1, 1, 2], [0], [0]>} : vector<1x8x8xf32>, vector<1x8x128xf32>, vector<1x8x128xf32> -> vector<1x8x128xf32>
    %32 = vector.extract_strided_slice %31 {offsets = [0, 0, 0], sizes = [1, 8, 32], strides = [1, 1, 1]} : vector<1x8x128xf32> to vector<1x8x32xf32>
    %33 = arith.addf %32, %0 : vector<1x8x32xf32>
    %c0_16 = arith.constant 0 : index
    %c0_17 = arith.constant 0 : index
    %c0_18 = arith.constant 0 : index
    %34 = vector.load %arg5[%c0_16, %c0_17, %c0_18] : memref<1x8x32xf32, #tpu.memory_space<vmem>>, vector<1x8x32xf32>
    tpu.vector_store %arg5[%c0_16, %c0_17, %c0_18], %33 {strides = array<i32>} : memref<1x8x32xf32, #tpu.memory_space<vmem>>, vector<1x8x32xf32>,
    %c0_19 = arith.constant 0 : index
    %c0_20 = arith.constant 0 : index
    %c0_21 = arith.constant 0 : index
    %35 = vector.load %arg6[%c0_19, %c0_20, %c0_21] : memref<1x8x8xf32, #tpu.memory_space<vmem>>, vector<1x8x8xf32>
    tpu.vector_store %arg6[%c0_19, %c0_20, %c0_21], %30 {strides = array<i32>} : memref<1x8x8xf32, #tpu.memory_space<vmem>>, vector<1x8x8xf32>,
    return
  }
  func.func @transform_0(%arg0: i32, %arg1: i32) -> (i32, i32, i32) {
    %c0_i32 = arith.constant 0 : i32
    %c0_i32_0 = arith.constant 0 : i32
    %c0_i32_1 = arith.constant 0 : i32
    return %arg0, %c0_i32, %c0_i32_0 : i32, i32, i32
  }
  func.func @transform_1(%arg0: i32, %arg1: i32) -> (i32, i32) {
    %c0_i32 = arith.constant 0 : i32
    %c0_i32_0 = arith.constant 0 : i32
    %c0_i32_1 = arith.constant 0 : i32
    return %c0_i32, %c0_i32_0 : i32, i32
  }
  func.func @transform_2(%arg0: i32, %arg1: i32) -> (i32, i32) {
    %c0_i32 = arith.constant 0 : i32
    %c0_i32_0 = arith.constant 0 : i32
    %c0_i32_1 = arith.constant 0 : i32
    return %c0_i32, %c0_i32_0 : i32, i32
  }
  func.func @transform_3(%arg0: i32, %arg1: i32) -> (i32, i32, i32) {
    %c0_i32 = arith.constant 0 : i32
    %c0_i32_0 = arith.constant 0 : i32
    return %arg0, %arg1, %c0_i32 : i32, i32, i32
  }
  func.func @transform_4(%arg0: i32, %arg1: i32) -> (i32, i32, i32) {
    %c0_i32 = arith.constant 0 : i32
    %c0_i32_0 = arith.constant 0 : i32
    return %arg0, %arg1, %c0_i32 : i32, i32, i32
  }
}

</mosaic_0001>

<llo_original>
// kernel: tpu_custom_call.1
$region0: #{tpu_custom_call.1}
  #allocation0 [shape = 'u32[]', space=smem, size = 0x4, offset = 0x4, fixed_abs, tag = 'smem constant byte address 0x4 - core index']
  #allocation1 [shape = 'u32[144,128]{1,0:T(1,128)}', space=vmem, size = 0x12000, scoped, tag = 'internal scratch']
  %s0 = inlined_call_operand.hbm [shape: f32[2,8,32], index: 0, kind: input, shape index: {}]
  %s1 = inlined_call_operand.hbm [shape: f32[32,384], index: 1, kind: input, shape index: {}]
  %s2 = inlined_call_operand.vmem [shape: f32[1,384], index: 2, kind: input, shape index: {}]
  %s3 = inlined_call_operand.hbm [shape: f32[2,8,32], index: 3, kind: output, shape index: {0}]
  %s4 = inlined_call_operand.hbm [shape: f32[2,8,8], index: 4, kind: output, shape index: {1}]
  %5 = xla_tuple %s3, %s4
  %s6 = sld [smem:[#allocation0]]
  $region61: #{tpu_custom_call.1} parent=0
    _
  %s8 = ssub.s32 1, %s6
  %s9 = scalar_select 0, %s8, %s6
  $region1: #{tpu_custom_call.1} parent=0
    #allocation2 [shape = 'u8[8192]{0}', space=vmem, size = 0x2000, scoped, tag = 'input window, operand 0']
    #allocation3 [shape = 's32[2]{0}', space=sflag, size = 0x8, scoped, tag = 'scoped memory for tpu_custom_call.1']
    #allocation4 [shape = 's32[2]{0}', space=sflag, size = 0x8, scoped, tag = 'scoped memory for tpu_custom_call.1']
    #allocation5 [shape = 'u8[49152]{0}', space=vmem, size = 0xc000, scoped, tag = 'input window, operand 1, single buffered']
    #allocation6 [shape = 's32[1]{0}', space=sflag, size = 0x4, scoped, tag = 'scoped memory for tpu_custom_call.1']
    #allocation7 [shape = 'u8[8192]{0}', space=vmem, size = 0x2000, scoped, tag = 'output window, operand 0']
    #allocation8 [shape = 'u8[8192]{0}', space=vmem, size = 0x2000, scoped, tag = 'output window, operand 1']
    #allocation9 [shape = 's32[2]{0}', space=sflag, size = 0x8, scoped, tag = 'scoped memory for tpu_custom_call.1']
    %10 = vsyncpa [#allocation3], 0
    %s11 = scalar_lea.sflag [#allocation3], 1
    %12 = vsyncpa %s11, 0
    %13 = vsyncpa [#allocation6], 0
    %14 = vsyncpa [#allocation4], 0
    %s15 = scalar_lea.sflag [#allocation4], 1
    %16 = vsyncpa %s15, 0
    %17 = vsyncpa [#allocation9], 0
    %s18 = scalar_lea.sflag [#allocation9], 1
    %19 = vsyncpa %s18, 0
    loop: start=0, step=1, limit=4
    $region2: #{tpu_custom_call.1} parent=1 // loop_pre_header
      _
    $region3: #{tpu_custom_call.1} parent=1 // loop_header
      %s21 = sphi 0, %s25
      %p22 = scmp.ge.s32.totalorder %s21, 4
      %s28 = sphi 0, %s40
      %s29 = sphi 0, %s36
      %s30 = sphi 0, %s28
      %s31 = sphi 0, %s29
      %s32 = sphi 0, %s30
      %s33 = sphi 0, %s31
      %s43 = sphi 0, %s45
      %s46 = sphi 0, %s43
      %s47 = sphi 0, %s46
      %s63 = sphi 0, %s47
      %s67 = sphi 0, %s67
      %s69 = sphi 0, %s67
      %s70 = sphi 0, %s69
      %s84 = sphi 0, %s70
      %s88 = sphi 0, %s88
      %s90 = sphi 0, %s88
      %s91 = sphi 0, %s90
      %s105 = sphi 0, %s91
      %s113 = sphi 0, %s115
      %s116 = sphi 0, %s113
      %s117 = sphi 0, %s116
      %s133 = sphi 0, %s117
      %s141 = sphi 0, %s143
      %s144 = sphi 0, %s141
      %s145 = sphi 0, %s144
      %s161 = sphi 0, %s145
    $region4: #{tpu_custom_call.1} parent=1 // loop_header_branch
      %24 = sbr.rel (%p22) target = $region8
    $region5: #{tpu_custom_call.1} parent=1 // loop_body
      %s26 = ssub.s32 %s21, 1
      %s27 = ssub.s32 %s21, 2
      %s34 = sadd.s32 1, %s29
      %p35 = scmp.ge.s32.totalorder %s34, 1
      %s36 = scalar_select %p35, 0, %s34
      %s37 = sadd.s32 1, %s28
      %s38 = scalar_select %p35, %s37, %s28
      %p39 = scmp.ge.s32.totalorder %s38, 2
      %s40 = scalar_select %p39, 0, %s38
      %s41 = ssub.s32 %s28, %s40
      %p42 = scmp.eq.s32.totalorder %s41, 0
      %s44 = sadd.s32 %s43, 1
      %s45 = scalar_select %p42, %s43, %s44
      %p48 = pneg %p42
      %p49 = scmp.eq.s32.totalorder %s21, 1
      %p50 = por %p48, %p49
      %p51 = scmp.ne.s32.totalorder %s43, %s46
      %p52 = scmp.eq.s32.totalorder %s21, 0
      %p53 = por %p51, %p52
      %p54 = scmp.ne.s32.totalorder %s43, %s46
      %p55 = scmp.eq.s32.totalorder %s26, 1
      %p56 = por %p54, %p55
      %p57 = scmp.ne.s32.totalorder %s46, %s47
      %p58 = scmp.eq.s32.totalorder %s26, 0
      %p59 = por %p57, %p58
      %p60 = scmp.ne.s32.totalorder %s46, %s47
      %p61 = scmp.eq.s32.totalorder %s27, 1
      %p62 = por %p60, %p61
      %p64 = scmp.ne.s32.totalorder %s47, %s63
      %p65 = scmp.eq.s32.totalorder %s27, 0
      %p66 = por %p64, %p65
      %s68 = sadd.s32 %s67, 1
      %p71 = scmp.eq.s32.totalorder %s21, 1
      %p72 = scmp.ne.s32.totalorder %s67, %s69
      %p73 = scmp.eq.s32.totalorder %s21, 0
      %p74 = por %p72, %p73
      %p75 = scmp.ne.s32.totalorder %s67, %s69
      %p76 = scmp.eq.s32.totalorder %s26, 1
      %p77 = por %p75, %p76
      %p78 = scmp.ne.s32.totalorder %s69, %s70
      %p79 = scmp.eq.s32.totalorder %s26, 0
      %p80 = por %p78, %p79
      %p81 = scmp.ne.s32.totalorder %s69, %s70
      %p82 = scmp.eq.s32.totalorder %s27, 1
      %p83 = por %p81, %p82
      %p85 = scmp.ne.s32.totalorder %s70, %s84
      %p86 = scmp.eq.s32.totalorder %s27, 0
      %p87 = por %p85, %p86
      %s89 = sadd.s32 %s88, 1
      %p92 = scmp.eq.s32.totalorder %s21, 1
      %p93 = scmp.ne.s32.totalorder %s88, %s90
      %p94 = scmp.eq.s32.totalorder %s21, 0
      %p95 = por %p93, %p94
      %p96 = scmp.ne.s32.totalorder %s88, %s90
      %p97 = scmp.eq.s32.totalorder %s26, 1
      %p98 = por %p96, %p97
      %p99 = scmp.ne.s32.totalorder %s90, %s91
      %p100 = scmp.eq.s32.totalorder %s26, 0
      %p101 = por %p99, %p100
      %p102 = scmp.ne.s32.totalorder %s90, %s91
      %p103 = scmp.eq.s32.totalorder %s27, 1
      %p104 = por %p102, %p103
      %p106 = scmp.ne.s32.totalorder %s91, %s105
      %p107 = scmp.eq.s32.totalorder %s27, 0
      %p108 = por %p106, %p107
      %s109 = ssub.s32 %s28, %s40
      %s110 = ssub.s32 %s29, %s36
      %s111 = sor.u32 %s109, %s110
      %p112 = scmp.eq.s32.totalorder %s111, 0
      %s114 = sadd.s32 %s113, 1
      %s115 = scalar_select %p112, %s113, %s114
      %p118 = pneg %p112
      %p119 = scmp.eq.s32.totalorder %s21, 1
      %p120 = por %p118, %p119
      %p121 = scmp.ne.s32.totalorder %s113, %s116
      %p122 = scmp.eq.s32.totalorder %s21, 0
      %p123 = por %p121, %p122
      %p124 = scmp.ne.s32.totalorder %s113, %s116
      %p125 = scmp.eq.s32.totalorder %s26, 1
      %p126 = por %p124, %p125
      %p127 = scmp.ne.s32.totalorder %s116, %s117
      %p128 = scmp.eq.s32.totalorder %s26, 0
      %p129 = por %p127, %p128
      %p130 = scmp.ne.s32.totalorder %s116, %s117
      %p131 = scmp.eq.s32.totalorder %s27, 1
      %p132 = por %p130, %p131
      %p134 = scmp.ne.s32.totalorder %s117, %s133
      %p135 = scmp.eq.s32.totalorder %s27, 0
      %p136 = por %p134, %p135
      %s137 = ssub.s32 %s28, %s40
      %s138 = ssub.s32 %s29, %s36
      %s139 = sor.u32 %s137, %s138
      %p140 = scmp.eq.s32.totalorder %s139, 0
      %s142 = sadd.s32 %s141, 1
      %s143 = scalar_select %p140, %s141, %s142
      %p146 = pneg %p140
      %p147 = scmp.eq.s32.totalorder %s21, 1
      %p148 = por %p146, %p147
      %p149 = scmp.ne.s32.totalorder %s141, %s144
      %p150 = scmp.eq.s32.totalorder %s21, 0
      %p151 = por %p149, %p150
      %p152 = scmp.ne.s32.totalorder %s141, %s144
      %p153 = scmp.eq.s32.totalorder %s26, 1
      %p154 = por %p152, %p153
      %p155 = scmp.ne.s32.totalorder %s144, %s145
      %p156 = scmp.eq.s32.totalorder %s26, 0
      %p157 = por %p155, %p156
      %p158 = scmp.ne.s32.totalorder %s144, %s145
      %p159 = scmp.eq.s32.totalorder %s27, 1
      %p160 = por %p158, %p159
      %p162 = scmp.ne.s32.totalorder %s145, %s161
      %p163 = scmp.eq.s32.totalorder %s27, 0
      %p164 = por %p162, %p163
      %p165 = scmp.le.s32.totalorder 1, %s21
      %p166 = scmp.lt.s32.totalorder %s21, 3
      %p167 = pnand %p165, %p166
      %p168 = pneg %p167
      // Predicated region
      $region9: #{tpu_custom_call.1} parent=5 // pred_check
        _
      $region10: #{tpu_custom_call.1} parent=5 // pred_check_branch
        %170 = sbr.rel (%p167) target = $region12
      $region11: #{tpu_custom_call.1} parent=5 // pred_region
        %s171 = ssub.s32 %s21, 1
        // Predicated region
        $region13: #{tpu_custom_call.1} parent=11 // pred_check
          %p172 = pneg %p80
        $region14: #{tpu_custom_call.1} parent=11 // pred_check_branch
          %174 = sbr.rel (%p172) target = $region16
        $region15: #{tpu_custom_call.1} parent=11 // pred_region
          %s176 = ssub.s32 1536, 1536
          %177 = vsyncadd [#allocation6], %s176
          %s178 = sshll.u32 [#allocation5], 4
          %s179 = int_to_ptr.vmem [resolvable:$true] %s178
          %184 = dma.hbm_to_vmem [thread:$0]  %s1, 1536, %s179, [#allocation6], 384, 384, 24
        $region16: #{tpu_custom_call.1} parent=11 // pred_fallthru
          _
        // Predicated region
        $region17: #{tpu_custom_call.1} parent=11 // pred_check
          %p185 = pneg %p101
        $region18: #{tpu_custom_call.1} parent=11 // pred_check_branch
          %187 = sbr.rel (%p185) target = $region20
        $region19: #{tpu_custom_call.1} parent=11 // pred_region
          _
        $region20: #{tpu_custom_call.1} parent=11 // pred_fallthru
          _
      $region12: #{tpu_custom_call.1} parent=5 // pred_fallthru
        _
      %p188 = scmp.lt.s32.totalorder %s21, 2
      // Predicated region
      $region21: #{tpu_custom_call.1} parent=5 // pred_check
        %p189 = pneg %p188
      $region22: #{tpu_custom_call.1} parent=5 // pred_check_branch
        %191 = sbr.rel (%p189) target = $region24
      $region23: #{tpu_custom_call.1} parent=5 // pred_region
        // Predicated region
        $region25: #{tpu_custom_call.1} parent=23 // pred_check
          %p192 = pneg %p53
        $region26: #{tpu_custom_call.1} parent=23 // pred_check_branch
          %194 = sbr.rel (%p192) target = $region28
        $region27: #{tpu_custom_call.1} parent=23 // pred_region
          %s195 = sand.u32 %s43, 1
          %s196 = scalar_lea.sflag [#allocation3], %s195
          %s197 = sand.u32 %s43, 1
          %s198 = smul.addr %s197, 8
          %s199 = scalar_lea.vmem [#allocation2], %s198
          %s201 = ssub.s32 128, 128
          %202 = vsyncadd %s196, %s201
          %s203 = smul.addr %s28, 128
          %s204 = scalar_lea.hbm %s0, %s203
          %s206 = sshll.u32 %s199, 4
          %s207 = int_to_ptr.vmem [resolvable:$true] %s206
          %209 = dma.hbm_to_vmem [thread:$0]  %s204, 128, %s207, %s196
        $region28: #{tpu_custom_call.1} parent=23 // pred_fallthru
          _
      $region24: #{tpu_custom_call.1} parent=5 // pred_fallthru
        _
      %p210 = scmp.le.s32.totalorder 1, %s21
      %p211 = scmp.lt.s32.totalorder %s21, 3
      %p212 = pnand %p210, %p211
      %p213 = pneg %p212
      // Predicated region
      $region29: #{tpu_custom_call.1} parent=5 // pred_check
        _
      $region30: #{tpu_custom_call.1} parent=5 // pred_check_branch
        %215 = sbr.rel (%p212) target = $region32
      $region31: #{tpu_custom_call.1} parent=5 // pred_region
        %s216 = ssub.s32 %s21, 1
        %s217 = sand.u32 %s46, 1
        %s218 = scalar_lea.sflag [#allocation3], %s217
        %s219 = sand.u32 %s46, 1
        %s220 = smul.addr %s219, 8
        %s221 = scalar_lea.vmem [#allocation2], %s220
        // Predicated region
        $region33: #{tpu_custom_call.1} parent=31 // pred_check
          %p222 = pneg %p59
        $region34: #{tpu_custom_call.1} parent=31 // pred_check_branch
          %224 = sbr.rel (%p222) target = $region36
        $region35: #{tpu_custom_call.1} parent=31 // pred_region
          %225 = dma.done %s218, 128
        $region36: #{tpu_custom_call.1} parent=31 // pred_fallthru
          _
        // Predicated region
        $region37: #{tpu_custom_call.1} parent=31 // pred_check
          %p226 = pneg %p80
        $region38: #{tpu_custom_call.1} parent=31 // pred_check_branch
          %228 = sbr.rel (%p226) target = $region40
        $region39: #{tpu_custom_call.1} parent=31 // pred_region
          %229 = dma.done [#allocation6], 1536
        $region40: #{tpu_custom_call.1} parent=31 // pred_fallthru
          _
        %s230 = sand.u32 %s46, 1
        %s231 = scalar_lea.sflag [#allocation3], %s230
        %s232 = sand.u32 %s46, 1
        %s233 = smul.addr %s232, 8
        %s234 = scalar_lea.vmem [#allocation2], %s233
        %p235 = pneg %p59
        %p236 = pneg %p56
        %p237 = pneg %p80
        %p238 = pneg %p77
        %p239 = pneg %p101
        %p240 = pneg %p98
        %p241 = pneg %p129
        %p242 = pneg %p126
        %s243 = sand.u32 %s116, 1
        %s244 = scalar_lea.sflag [#allocation4], %s243
        %s245 = sand.u32 %s116, 1
        %s246 = smul.addr %s245, 8
        %s247 = scalar_lea.vmem [#allocation7], %s246
        %p248 = pneg %p157
        %p249 = pneg %p154
        %s250 = sand.u32 %s144, 1
        %s251 = scalar_lea.sflag [#allocation9], %s250
        %s252 = sand.u32 %s144, 1
        %s253 = smul.addr %s252, 8
        %s254 = scalar_lea.vmem [#allocation8], %s253
        %v255 = vld [vmem:[%s221] sm:$0xff]
        %v256 = vld [vmem:[#allocation5] sm:$0xff]
        %v257 = vld [vmem:[#allocation5 + $0x8] sm:$0xff]
        %v258 = vld [vmem:[#allocation5 + $0x10] sm:$0xff]
        %v259 = vld [vmem:[#allocation5 + $0x18] sm:$0xff]
        %v260 = vld [vmem:[#allocation5 + $0x20] sm:$0xff]
        %v261 = vld [vmem:[#allocation5 + $0x28] sm:$0xff]
        %v262 = vld [vmem:[#allocation5 + $0x30] sm:$0xff]
        %v263 = vld [vmem:[#allocation5 + $0x38] sm:$0xff]
        %v264 = vld [vmem:[#allocation5 + $0x40] sm:$0xff]
        %v265 = vld [vmem:[#allocation5 + $0x48] sm:$0xff]
        %v266 = vld [vmem:[#allocation5 + $0x50] sm:$0xff]
        %v267 = vld [vmem:[#allocation5 + $0x58] sm:$0xff]
        %v268 = vld [vmem:[%s2] sm:$0x7]
        %v270 = vlaneseq
        %v271 = vshrl.u32 %v270, 7
        %v272 = vsub.s32 0, %v271
        %v273 = vrot.slane %v268, %v272
        %v274 = vlaneseq
        %v275 = vshrl.u32 %v274, 7
        %v276 = vsub.s32 1, %v275
        %v277 = vrot.slane %v268, %v276
        %v278 = vlaneseq
        %v279 = vshrl.u32 %v278, 7
        %v280 = vsub.s32 2, %v279
        %v281 = vrot.slane %v268, %v280
        %vm285 = vcmask 261120
        %v287 = vsel %vm285, %v255, 0
        %289 = vmatprep.subr.mxu0 %v257
        %290 = vmatpush1.msra.mxu0 %v256
        %291 = vmatprep.subr.mxu0 %v260
        %292 = vmatpush1.msra.mxu0 %v259
        %293 = vmatprep.subr.mxu0 %v263
        %294 = vmatpush1.msra.mxu0 %v262
        %295 = vmatprep.subr.mxu0 %v266
        %296 = vmatpush1.msra.mxu0 %v265
        %297 = vmatprep.subr.mxu0 0.0
        %298 = vmatpush1.msra.mxu0 0.0
        %299 = vmatprep.subr.mxu0 0.0
        %300 = vmatpush1.msra.mxu0 0.0
        %301 = vmatprep.subr.mxu0 0.0
        %302 = vmatpush1.msra.mxu0 0.0
        %303 = vmatprep.subr.mxu0 0.0
        %304 = vmatpush1.msra.mxu0 0.0
        %305 = vmatprep.subr.mxu0 0.0
        %306 = vmatpush1.msra.mxu0 0.0
        %307 = vmatprep.subr.mxu0 0.0
        %308 = vmatpush1.msra.mxu0 0.0
        %309 = vmatprep.subr.mxu0 0.0
        %310 = vmatpush1.msra.mxu0 0.0
        %311 = vmatprep.subr.mxu0 0.0
        %312 = vmatpush1.msra.mxu0 0.0
        %313 = vmatprep.subr.mxu0 0.0
        %314 = vmatpush1.msra.mxu0 0.0
        %315 = vmatprep.subr.mxu0 0.0
        %316 = vmatpush1.msra.mxu0 0.0
        %317 = vmatprep.subr.mxu0 0.0
        %318 = vmatpush1.msra.mxu0 0.0
        %319 = vmatprep.subr.mxu0 0.0
        %320 = vmatpush1.msra.mxu0 0.0
        %321 = vmatprep.subr.mxu0 0.0
        %322 = vmatpush1.msra.mxu0 0.0
        %323 = vmatprep.subr.mxu0 0.0
        %324 = vmatpush1.msra.mxu0 0.0
        %325 = vmatprep.subr.mxu0 0.0
        %326 = vmatpush1.msra.mxu0 0.0
        %327 = vmatprep.subr.mxu0 0.0
        %328 = vmatpush1.msra.mxu0 0.0
        %329 = vmatprep.subr.mxu0 0.0
        %330 = vmatpush1.msra.mxu0 0.0
        %331 = vmatprep.subr.mxu0 0.0
        %332 = vmatpush1.msra.mxu0 0.0
        %333 = vmatprep.subr.mxu0 0.0
        %334 = vmatpush1.msra.mxu0 0.0
        %335 = vmatprep.subr.mxu0 0.0
        %336 = vmatpush1.msra.mxu0 0.0
        %337 = vmatprep.subr.mxu0 0.0
        %338 = vmatpush1.msra.mxu0 0.0
        %339 = vmatprep.subr.mxu0 0.0
        %340 = vmatpush1.msra.mxu0 0.0
        %341 = vmatprep.subr.mxu0 0.0
        %342 = vmatpush1.msra.mxu0 0.0
        %343 = vmatprep.subr.mxu0 0.0
        %344 = vmatpush1.msra.mxu0 0.0
        %345 = vmatprep.subr.mxu0 0.0
        %346 = vmatpush1.msra.mxu0 0.0
        %347 = vmatprep.subr.mxu0 0.0
        %348 = vmatpush1.msra.mxu0 0.0
        %349 = vmatprep.subr.mxu0 0.0
        %350 = vmatpush1.msra.mxu0 0.0
        %351 = vmatprep.subr.mxu0 0.0
        %352 = vmatpush1.msra.mxu0 0.0
        %353 = vmatprep.mubr.f32.mxu0 0.0
        %354 = vmatmul.mubr.f32.gmra.mrb[0].mxu0 %v287
        %v355 = vpop.f32.mrb[0].mxu0
        %v356 = vadd.f32 %v273, %v355
        %v357 = vpop.f32.mrb[0].mxu0
        %v358 = vadd.f32 %v277, %v357
        %359 = vdwg.mxu0
        %360 = vmatprep.subr.mxu0 0.0
        %361 = vmatpush1.msra.mxu0 %v258
        %362 = vmatprep.subr.mxu0 0.0
        %363 = vmatpush1.msra.mxu0 %v261
        %364 = vmatprep.subr.mxu0 0.0
        %365 = vmatpush1.msra.mxu0 %v264
        %366 = vmatprep.subr.mxu0 0.0
        %367 = vmatpush1.msra.mxu0 %v267
        %368 = vmatprep.subr.mxu0 0.0
        %369 = vmatpush1.msra.mxu0 0.0
        %370 = vmatprep.subr.mxu0 0.0
        %371 = vmatpush1.msra.mxu0 0.0
        %372 = vmatprep.subr.mxu0 0.0
        %373 = vmatpush1.msra.mxu0 0.0
        %374 = vmatprep.subr.mxu0 0.0
        %375 = vmatpush1.msra.mxu0 0.0
        %376 = vmatprep.subr.mxu0 0.0
        %377 = vmatpush1.msra.mxu0 0.0
        %378 = vmatprep.subr.mxu0 0.0
        %379 = vmatpush1.msra.mxu0 0.0
        %380 = vmatprep.subr.mxu0 0.0
        %381 = vmatpush1.msra.mxu0 0.0
        %382 = vmatprep.subr.mxu0 0.0
        %383 = vmatpush1.msra.mxu0 0.0
        %384 = vmatprep.subr.mxu0 0.0
        %385 = vmatpush1.msra.mxu0 0.0
        %386 = vmatprep.subr.mxu0 0.0
        %387 = vmatpush1.msra.mxu0 0.0
        %388 = vmatprep.subr.mxu0 0.0
        %389 = vmatpush1.msra.mxu0 0.0
        %390 = vmatprep.subr.mxu0 0.0
        %391 = vmatpush1.msra.mxu0 0.0
        %392 = vmatprep.subr.mxu0 0.0
        %393 = vmatpush1.msra.mxu0 0.0
        %394 = vmatprep.subr.mxu0 0.0
        %395 = vmatpush1.msra.mxu0 0.0
        %396 = vmatprep.subr.mxu0 0.0
        %397 = vmatpush1.msra.mxu0 0.0
        %398 = vmatprep.subr.mxu0 0.0
        %399 = vmatpush1.msra.mxu0 0.0
        %400 = vmatprep.subr.mxu0 0.0
        %401 = vmatpush1.msra.mxu0 0.0
        %402 = vmatprep.subr.mxu0 0.0
        %403 = vmatpush1.msra.mxu0 0.0
        %404 = vmatprep.subr.mxu0 0.0
        %405 = vmatpush1.msra.mxu0 0.0
        %406 = vmatprep.subr.mxu0 0.0
        %407 = vmatpush1.msra.mxu0 0.0
        %408 = vmatprep.subr.mxu0 0.0
        %409 = vmatpush1.msra.mxu0 0.0
        %410 = vmatprep.subr.mxu0 0.0
        %411 = vmatpush1.msra.mxu0 0.0
        %412 = vmatprep.subr.mxu0 0.0
        %413 = vmatpush1.msra.mxu0 0.0
        %414 = vmatprep.subr.mxu0 0.0
        %415 = vmatpush1.msra.mxu0 0.0
        %416 = vmatprep.subr.mxu0 0.0
        %417 = vmatpush1.msra.mxu0 0.0
        %418 = vmatprep.subr.mxu0 0.0
        %419 = vmatpush1.msra.mxu0 0.0
        %420 = vmatprep.subr.mxu0 0.0
        %421 = vmatpush1.msra.mxu0 0.0
        %422 = vmatprep.subr.mxu0 0.0
        %423 = vmatpush1.msra.mxu0 0.0
        %424 = vmatprep.mubr.f32.mxu0 0.0
        %425 = vmatmul.mubr.f32.gmra.mrb[0].mxu0 %v287
        %v426 = vpop.f32.mrb[0].mxu0
        %v427 = vadd.f32 %v281, %v426
        %v428 = vpop.f32.mrb[0].mxu0
        %429 = vdwg.mxu0
        %430 = vmatprep.subr.mxu0 0.0
        %431 = vmatpush1.xpose.msra.mxu0 %v358
        %432 = vmatprep.subr.mxu0 0.0
        %433 = vmatpush1.xpose.msra.mxu0 0.0
        %434 = vmatprep.subr.mxu0 0.0
        %435 = vmatpush1.xpose.msra.mxu0 0.0
        %436 = vmatprep.subr.mxu0 0.0
        %437 = vmatpush1.xpose.msra.mxu0 0.0
        %438 = vmatprep.subr.mxu0 0.0
        %439 = vmatpush1.xpose.msra.mxu0 0.0
        %440 = vmatprep.subr.mxu0 0.0
        %441 = vmatpush1.xpose.msra.mxu0 0.0
        %442 = vmatprep.subr.mxu0 0.0
        %443 = vmatpush1.xpose.msra.mxu0 0.0
        %444 = vmatprep.subr.mxu0 0.0
        %445 = vmatpush1.xpose.msra.mxu0 0.0
        %446 = vmatprep.subr.mxu0 0.0
        %447 = vmatpush1.xpose.msra.mxu0 0.0
        %448 = vmatprep.subr.mxu0 0.0
        %449 = vmatpush1.xpose.msra.mxu0 0.0
        %450 = vmatprep.subr.mxu0 0.0
        %451 = vmatpush1.xpose.msra.mxu0 0.0
        %452 = vmatprep.subr.mxu0 0.0
        %453 = vmatpush1.xpose.msra.mxu0 0.0
        %454 = vmatprep.subr.mxu0 0.0
        %455 = vmatpush1.xpose.msra.mxu0 0.0
        %456 = vmatprep.subr.mxu0 0.0
        %457 = vmatpush1.xpose.msra.mxu0 0.0
        %458 = vmatprep.subr.mxu0 0.0
        %459 = vmatpush1.xpose.msra.mxu0 0.0
        %460 = vmatprep.subr.mxu0 0.0
        %461 = vmatpush1.xpose.msra.mxu0 0.0
        %462 = vmatprep.subr.mxu0 0.0
        %463 = vmatpush1.xpose.msra.mxu0 0.0
        %464 = vmatprep.subr.mxu0 0.0
        %465 = vmatpush1.xpose.msra.mxu0 0.0
        %466 = vmatprep.subr.mxu0 0.0
        %467 = vmatpush1.xpose.msra.mxu0 0.0
        %468 = vmatprep.subr.mxu0 0.0
        %469 = vmatpush1.xpose.msra.mxu0 0.0
        %470 = vmatprep.subr.mxu0 0.0
        %471 = vmatpush1.xpose.msra.mxu0 0.0
        %472 = vmatprep.subr.mxu0 0.0
        %473 = vmatpush1.xpose.msra.mxu0 0.0
        %474 = vmatprep.subr.mxu0 0.0
        %475 = vmatpush1.xpose.msra.mxu0 0.0
        %476 = vmatprep.subr.mxu0 0.0
        %477 = vmatpush1.xpose.msra.mxu0 0.0
        %478 = vmatprep.subr.mxu0 0.0
        %479 = vmatpush1.xpose.msra.mxu0 0.0
        %480 = vmatprep.subr.mxu0 0.0
        %481 = vmatpush1.xpose.msra.mxu0 0.0
        %482 = vmatprep.subr.mxu0 0.0
        %483 = vmatpush1.xpose.msra.mxu0 0.0
        %484 = vmatprep.subr.mxu0 0.0
        %485 = vmatpush1.xpose.msra.mxu0 0.0
        %486 = vmatprep.subr.mxu0 0.0
        %487 = vmatpush1.xpose.msra.mxu0 0.0
        %488 = vmatprep.subr.mxu0 0.0
        %489 = vmatpush1.xpose.msra.mxu0 0.0
        %490 = vmatprep.subr.mxu0 0.0
        %491 = vmatpush1.xpose.msra.mxu0 0.0
        %492 = vmatprep.subr.mxu0 0.0
        %493 = vmatpush1.xpose.msra.mxu0 0.0
        %494 = vmatprep.mubr.f32.mxu0 0.0
        %495 = vmatmul.mubr.f32.gmra.mrb[0].mxu0 %v356
        %v496 = vpop.f32.mrb[0].mxu0
        %v497 = vadd.f32 0.0, %v496
        %v498 = vpop.f32.mrb[0].mxu0
        %499 = vdwg.mxu0
        %500 = vmatprep.subr.mxu0 0.0
        %501 = vmatpush1.xpose.msra.mxu0 %v356
        %502 = vmatprep.subr.mxu0 0.0
        %503 = vmatpush1.xpose.msra.mxu0 0.0
        %504 = vmatprep.subr.mxu0 0.0
        %505 = vmatpush1.xpose.msra.mxu0 0.0
        %506 = vmatprep.subr.mxu0 0.0
        %507 = vmatpush1.xpose.msra.mxu0 0.0
        %508 = vmatprep.subr.mxu0 0.0
        %509 = vmatpush1.xpose.msra.mxu0 0.0
        %510 = vmatprep.subr.mxu0 0.0
        %511 = vmatpush1.xpose.msra.mxu0 0.0
        %512 = vmatprep.subr.mxu0 0.0
        %513 = vmatpush1.xpose.msra.mxu0 0.0
        %514 = vmatprep.subr.mxu0 0.0
        %515 = vmatpush1.xpose.msra.mxu0 0.0
        %516 = vmatprep.subr.mxu0 0.0
        %517 = vmatpush1.xpose.msra.mxu0 0.0
        %518 = vmatprep.subr.mxu0 0.0
        %519 = vmatpush1.xpose.msra.mxu0 0.0
        %520 = vmatprep.subr.mxu0 0.0
        %521 = vmatpush1.xpose.msra.mxu0 0.0
        %522 = vmatprep.subr.mxu0 0.0
        %523 = vmatpush1.xpose.msra.mxu0 0.0
        %524 = vmatprep.subr.mxu0 0.0
        %525 = vmatpush1.xpose.msra.mxu0 0.0
        %526 = vmatprep.subr.mxu0 0.0
        %527 = vmatpush1.xpose.msra.mxu0 0.0
        %528 = vmatprep.subr.mxu0 0.0
        %529 = vmatpush1.xpose.msra.mxu0 0.0
        %530 = vmatprep.subr.mxu0 0.0
        %531 = vmatpush1.xpose.msra.mxu0 0.0
        %532 = vmatprep.subr.mxu0 0.0
        %533 = vmatpush1.xpose.msra.mxu0 0.0
        %534 = vmatprep.subr.mxu0 0.0
        %535 = vmatpush1.xpose.msra.mxu0 0.0
        %536 = vmatprep.subr.mxu0 0.0
        %537 = vmatpush1.xpose.msra.mxu0 0.0
        %538 = vmatprep.subr.mxu0 0.0
        %539 = vmatpush1.xpose.msra.mxu0 0.0
        %540 = vmatprep.subr.mxu0 0.0
        %541 = vmatpush1.xpose.msra.mxu0 0.0
        %542 = vmatprep.subr.mxu0 0.0
        %543 = vmatpush1.xpose.msra.mxu0 0.0
        %544 = vmatprep.subr.mxu0 0.0
        %545 = vmatpush1.xpose.msra.mxu0 0.0
        %546 = vmatprep.subr.mxu0 0.0
        %547 = vmatpush1.xpose.msra.mxu0 0.0
        %548 = vmatprep.subr.mxu0 0.0
        %549 = vmatpush1.xpose.msra.mxu0 0.0
        %550 = vmatprep.subr.mxu0 0.0
        %551 = vmatpush1.xpose.msra.mxu0 0.0
        %552 = vmatprep.subr.mxu0 0.0
        %553 = vmatpush1.xpose.msra.mxu0 0.0
        %554 = vmatprep.subr.mxu0 0.0
        %555 = vmatpush1.xpose.msra.mxu0 0.0
        %556 = vmatprep.subr.mxu0 0.0
        %557 = vmatpush1.xpose.msra.mxu0 0.0
        %558 = vmatprep.subr.mxu0 0.0
        %559 = vmatpush1.xpose.msra.mxu0 0.0
        %560 = vmatprep.subr.mxu0 0.0
        %561 = vmatpush1.xpose.msra.mxu0 0.0
        %562 = vmatprep.subr.mxu0 0.0
        %563 = vmatpush1.xpose.msra.mxu0 0.0
        %564 = vmatprep.mubr.f32.mxu0 0.0
        %565 = vmatmul.mubr.f32.gmra.mrb[0].mxu0 %v358
        %v566 = vpop.f32.mrb[0].mxu0
        %v567 = vadd.f32 0.0, %v566
        %v568 = vpop.f32.mrb[0].mxu0
        %569 = vdwg.mxu0
        %v570 = vmul.f32 %v497, 0.17677669
        %v571 = vmax.f32 %v570, 0.0
        %v572 = vmul.f32 %v567, 0.17677669
        %v573 = vmax.f32 %v572, 0.0
        %v574 = vadd.f32 %v571, %v573
        %v575 = vmul.f32 %v574, 0.5
        %vm576 = vcmask 64512
        %v577 = vsel %vm576, %v575, 0.0
        %578 = vadd.xlane.f32.xlu0 %v577
        %v579 = vpop.xlane.xlu0 %578
        %v580 = vadd.f32 %v579, 1e-08
        %v581 = vrcp.pop %v580
        %v582 = vmul.f32 %v575, %v581
        %v584 = vsel %vm576, %v582, 0
        %586 = vmatprep.subr.mxu0 0.0
        %587 = vmatpush1.msra.mxu0 %v427
        %588 = vmatprep.subr.mxu0 0.0
        %589 = vmatpush1.msra.mxu0 0.0
        %590 = vmatprep.subr.mxu0 0.0
        %591 = vmatpush1.msra.mxu0 0.0
        %592 = vmatprep.subr.mxu0 0.0
        %593 = vmatpush1.msra.mxu0 0.0
        %594 = vmatprep.subr.mxu0 0.0
        %595 = vmatpush1.msra.mxu0 0.0
        %596 = vmatprep.subr.mxu0 0.0
        %597 = vmatpush1.msra.mxu0 0.0
        %598 = vmatprep.subr.mxu0 0.0
        %599 = vmatpush1.msra.mxu0 0.0
        %600 = vmatprep.subr.mxu0 0.0
        %601 = vmatpush1.msra.mxu0 0.0
        %602 = vmatprep.subr.mxu0 0.0
        %603 = vmatpush1.msra.mxu0 0.0
        %604 = vmatprep.subr.mxu0 0.0
        %605 = vmatpush1.msra.mxu0 0.0
        %606 = vmatprep.subr.mxu0 0.0
        %607 = vmatpush1.msra.mxu0 0.0
        %608 = vmatprep.subr.mxu0 0.0
        %609 = vmatpush1.msra.mxu0 0.0
        %610 = vmatprep.subr.mxu0 0.0
        %611 = vmatpush1.msra.mxu0 0.0
        %612 = vmatprep.subr.mxu0 0.0
        %613 = vmatpush1.msra.mxu0 0.0
        %614 = vmatprep.subr.mxu0 0.0
        %615 = vmatpush1.msra.mxu0 0.0
        %616 = vmatprep.subr.mxu0 0.0
        %617 = vmatpush1.msra.mxu0 0.0
        %618 = vmatprep.subr.mxu0 0.0
        %619 = vmatpush1.msra.mxu0 0.0
        %620 = vmatprep.subr.mxu0 0.0
        %621 = vmatpush1.msra.mxu0 0.0
        %622 = vmatprep.subr.mxu0 0.0
        %623 = vmatpush1.msra.mxu0 0.0
        %624 = vmatprep.subr.mxu0 0.0
        %625 = vmatpush1.msra.mxu0 0.0
        %626 = vmatprep.subr.mxu0 0.0
        %627 = vmatpush1.msra.mxu0 0.0
        %628 = vmatprep.subr.mxu0 0.0
        %629 = vmatpush1.msra.mxu0 0.0
        %630 = vmatprep.subr.mxu0 0.0
        %631 = vmatpush1.msra.mxu0 0.0
        %632 = vmatprep.subr.mxu0 0.0
        %633 = vmatpush1.msra.mxu0 0.0
        %634 = vmatprep.subr.mxu0 0.0
        %635 = vmatpush1.msra.mxu0 0.0
        %636 = vmatprep.subr.mxu0 0.0
        %637 = vmatpush1.msra.mxu0 0.0
        %638 = vmatprep.subr.mxu0 0.0
        %639 = vmatpush1.msra.mxu0 0.0
        %640 = vmatprep.subr.mxu0 0.0
        %641 = vmatpush1.msra.mxu0 0.0
        %642 = vmatprep.subr.mxu0 0.0
        %643 = vmatpush1.msra.mxu0 0.0
        %644 = vmatprep.subr.mxu0 0.0
        %645 = vmatpush1.msra.mxu0 0.0
        %646 = vmatprep.subr.mxu0 0.0
        %647 = vmatpush1.msra.mxu0 0.0
        %648 = vmatprep.subr.mxu0 0.0
        %649 = vmatpush1.msra.mxu0 0.0
        %650 = vmatprep.mubr.f32.mxu0 0.0
        %651 = vmatmul.mubr.f32.gmra.mrb[0].mxu0 %v584
        %v652 = vpop.f32.mrb[0].mxu0
        %v653 = vadd.f32 0.0, %v652
        %v654 = vpop.f32.mrb[0].mxu0
        %655 = vdwg.mxu0
        %v656 = vadd.f32 %v653, %v255
        %657 = vst.msk [vmem:[%s247] sm:$0xff] %vm285, %v656
        %658 = vst.msk [vmem:[%s254] sm:$0xff] %vm576, %v582
        %s659 = sand.u32 %s116, 1
        %s660 = scalar_lea.sflag [#allocation4], %s659
        %s661 = sand.u32 %s116, 1
        %s662 = smul.addr %s661, 8
        %s663 = scalar_lea.vmem [#allocation7], %s662
        %s664 = sand.u32 %s144, 1
        %s665 = scalar_lea.sflag [#allocation9], %s664
        %s666 = sand.u32 %s144, 1
        %s667 = smul.addr %s666, 8
        %s668 = scalar_lea.vmem [#allocation8], %s667
        // Predicated region
        $region41: #{tpu_custom_call.1} parent=31 // pred_check
          %p669 = pneg %p126
        $region42: #{tpu_custom_call.1} parent=31 // pred_check_branch
          %671 = sbr.rel (%p669) target = $region44
        $region43: #{tpu_custom_call.1} parent=31 // pred_region
          %s673 = ssub.s32 128, 128
          %674 = vsyncadd %s660, %s673
          %s675 = sadd.s32 %s31, %s30
          %s676 = smul.addr %s675, 128
          %s677 = scalar_lea.hbm %s3, %s676
          %s679 = sshll.u32 %s663, 4
          %s680 = int_to_ptr.vmem [resolvable:$true] %s679
          %682 = dma.vmem_to_hbm [thread:$0]  %s680, 128, %s677, %s660
        $region44: #{tpu_custom_call.1} parent=31 // pred_fallthru
          _
        // Predicated region
        $region45: #{tpu_custom_call.1} parent=31 // pred_check
          %p683 = pneg %p154
        $region46: #{tpu_custom_call.1} parent=31 // pred_check_branch
          %685 = sbr.rel (%p683) target = $region48
        $region47: #{tpu_custom_call.1} parent=31 // pred_region
          %s687 = ssub.s32 128, 128
          %688 = vsyncadd %s665, %s687
          %s689 = sadd.s32 %s31, %s30
          %s690 = smul.addr %s689, 128
          %s691 = scalar_lea.hbm %s4, %s690
          %s693 = sshll.u32 %s668, 4
          %s694 = int_to_ptr.vmem [resolvable:$true] %s693
          %696 = dma.vmem_to_hbm [thread:$0]  %s694, 128, %s691, %s665
        $region48: #{tpu_custom_call.1} parent=31 // pred_fallthru
          _
      $region32: #{tpu_custom_call.1} parent=5 // pred_fallthru
        _
      %p697 = scmp.le.s32.totalorder 2, %s21
      // Predicated region
      $region49: #{tpu_custom_call.1} parent=5 // pred_check
        %p698 = pneg %p697
      $region50: #{tpu_custom_call.1} parent=5 // pred_check_branch
        %700 = sbr.rel (%p698) target = $region52
      $region51: #{tpu_custom_call.1} parent=5 // pred_region
        %s701 = ssub.s32 %s21, 2
        // Predicated region
        $region53: #{tpu_custom_call.1} parent=51 // pred_check
          %p702 = pneg %p132
        $region54: #{tpu_custom_call.1} parent=51 // pred_check_branch
          %704 = sbr.rel (%p702) target = $region56
        $region55: #{tpu_custom_call.1} parent=51 // pred_region
          %s705 = sand.u32 %s117, 1
          %s706 = scalar_lea.sflag [#allocation4], %s705
          %s707 = sand.u32 %s117, 1
          %s708 = smul.addr %s707, 8
          %s709 = scalar_lea.vmem [#allocation7], %s708
          %710 = dma.done %s706, 128
        $region56: #{tpu_custom_call.1} parent=51 // pred_fallthru
          _
        // Predicated region
        $region57: #{tpu_custom_call.1} parent=51 // pred_check
          %p711 = pneg %p160
        $region58: #{tpu_custom_call.1} parent=51 // pred_check_branch
          %713 = sbr.rel (%p711) target = $region60
        $region59: #{tpu_custom_call.1} parent=51 // pred_region
          %s714 = sand.u32 %s145, 1
          %s715 = scalar_lea.sflag [#allocation9], %s714
          %s716 = sand.u32 %s145, 1
          %s717 = smul.addr %s716, 8
          %s718 = scalar_lea.vmem [#allocation8], %s717
          %719 = dma.done %s715, 128
        $region60: #{tpu_custom_call.1} parent=51 // pred_fallthru
          _
      $region52: #{tpu_custom_call.1} parent=5 // pred_fallthru
        _
    $region6: #{tpu_custom_call.1} parent=1 // loop_footer
      %s25 = sadd.s32 1, %s21
    $region7: #{tpu_custom_call.1} parent=1 // loop_footer_branch
      %20 = sbr.rel target = $region3
    $region8: #{tpu_custom_call.1} parent=1 // loop_exit
      _
    %720 = vsyncpa [#allocation3], 1
    %s721 = scalar_lea.sflag [#allocation3], 1
    %722 = vsyncpa %s721, 1
    %723 = vsyncpa [#allocation6], 1
    %724 = vsyncpa [#allocation4], 1
    %s725 = scalar_lea.sflag [#allocation4], 1
    %726 = vsyncpa %s725, 1
    %727 = vsyncpa [#allocation9], 1
    %s728 = scalar_lea.sflag [#allocation9], 1
    %729 = vsyncpa %s728, 1

</llo_original>
